<compile_context>
chip_gen: v7x
topology: tpu7x:2x2x1
jax: 0.10.0
libtpu: 0.0.40
codegen_flags: <defaults>
</compile_context>

<pallas_src>
import functools

import jax
import jax.numpy as jnp
from jax.experimental import pallas as pl
from jax.experimental.pallas import tpu as pltpu


def _cdiv(a: int, b: int) -> int:
    return -(-a // b)


def _round_up(x: int, m: int) -> int:
    return _cdiv(x, m) * m


def _vmem_capacity_bytes() -> int:
    """Physical VMEM of the current chip; conservative (v7x) fallback."""
    try:
        info = pltpu.get_tpu_info()
        cap = getattr(info, "vmem_capacity_bytes", None)
        if cap:
            return int(cap)
    except Exception:
        pass
    return 64 * 1024 * 1024


def _ensemble_fc_kernel(x_ref, w_ref, b_ref, o_ref, *, e_blk, compute_dtype):
    # x_ref: (E_blk, TB, IN)   w_ref: (E_blk, IN, TN)
    # b_ref: (E_blk, 1,  TN)   o_ref: (E_blk, TB, TN)
    #
    # Unrolled static loop over the ensemble members of this block: each member
    # is an independent (TB, IN) @ (IN, TN) MXU matmul.  Each member's f32
    # accumulator dies as soon as it is stored (low vreg/VMEM pressure) while
    # the MXU pushes stay back-to-back.
    for e in range(e_blk):
        acc = jnp.dot(
            x_ref[e].astype(compute_dtype),
            w_ref[e].astype(compute_dtype),
            preferred_element_type=jnp.float32,
        )
        o_ref[e] = (acc + b_ref[e].astype(jnp.float32)).astype(o_ref.dtype)


def ensemble_fc(x, weight, bias, *, use_bf16: bool = True):
    """x: [E, B, IN], weight: [E, IN, OUT], bias: [E, 1, OUT] -> [E, B, OUT]."""
    assert x.ndim == 3 and weight.ndim == 3 and bias.ndim == 3
    E, B, IN = x.shape
    OUT = weight.shape[2]
    assert weight.shape == (E, IN, OUT)
    assert bias.shape == (E, 1, OUT)
    assert x.shape[0] == E  # mirrors the module's forward assert
    out_dtype = x.dtype

    x_isz = jnp.dtype(x.dtype).itemsize
    w_isz = jnp.dtype(weight.dtype).itemsize
    b_isz = jnp.dtype(bias.dtype).itemsize
    o_isz = jnp.dtype(out_dtype).itemsize

    # ---- VMEM budget (chip-aware) ------------------------------------------
    # v5e/v6e: 128 MiB physical -> limit 96 MiB.  v7x: 64 MiB -> limit 48 MiB.
    vmem_cap = _vmem_capacity_bytes()
    vmem_limit = int(min((vmem_cap * 3) // 4, 96 * 1024 * 1024))
    usable = vmem_limit - 4 * 1024 * 1024  # headroom for internal scratch

    # ---- tile selection (no HBM padding anywhere) ----------------------------
    # OUT tile: full extent when it fits (exempt from the 128-lane rule),
    # otherwise a lane-dense tile that minimizes the ragged tail.
    if OUT <= 512:
        TN = OUT
    else:
        TN = min((512, 256, 128), key=lambda t: (_cdiv(OUT, t) * t - OUT, -t))
    n_n = _cdiv(OUT, TN)

    # B tile: full extent when it fits (exempt from the 8-row rule), otherwise
    # a 16-row aligned tile (bf16 sublane packing) with minimal padding waste.
    TB_MAX = 512
    if B <= TB_MAX:
        TB = B
    else:
        TB = _round_up(_cdiv(B, _cdiv(B, TB_MAX)), 16)
    n_b = _cdiv(B, TB)

    # Ensemble block: as many members per grid step as the double-buffered
    # working set + f32 accumulator allow; capped to keep the unroll sane.
    per_member = TB * IN * x_isz + IN * TN * w_isz + TN * b_isz + TB * TN * o_isz
    acc_bytes = 2 * TB * TN * 4  # f32 accumulator (+1 for scheduler overlap)
    e_budget = max(1, (usable - acc_bytes) // max(1, 2 * per_member))
    E_blk = int(max(1, min(E, 32, e_budget)))
    n_e = _cdiv(E, E_blk)

    # Guarantee >=2 grid steps where possible so both v7x TensorCores get work
    # (a 1-step grid idles a core; harmless on 1-TC v5e/v6e).
    if n_e * n_b * n_n == 1:
        if E > 1:
            E_blk = _cdiv(E, 2)
            n_e = _cdiv(E, E_blk)
        elif B > 8:
            TB = _round_up(_cdiv(B, 2), 8)
            n_b = _cdiv(B, TB)

    # ---- grid order: keep the larger operand VMEM-resident -------------------
    # (e, n, b): weight resident (read once), x re-read n_n times.
    # (e, b, n): x resident (read once), weight re-read n_b times.
    x_hbm = E * B * IN * x_isz
    w_hbm = E * IN * OUT * w_isz
    b_innermost = (n_n * x_hbm + w_hbm) <= (x_hbm + n_b * w_hbm)

    if b_innermost:
        grid = (n_e, n_n, n_b)
        x_spec = pl.BlockSpec((E_blk, TB, IN), lambda e, n, b: (e, b, 0))
        w_spec = pl.BlockSpec((E_blk, IN, TN), lambda e, n, b: (e, 0, n))
        s_spec = pl.BlockSpec((E_blk, 1, TN), lambda e, n, b: (e, 0, n))
        o_spec = pl.BlockSpec((E_blk, TB, TN), lambda e, n, b: (e, b, n))
        in_traffic = n_n * x_hbm + w_hbm
    else:
        grid = (n_e, n_b, n_n)
        x_spec = pl.BlockSpec((E_blk, TB, IN), lambda e, b, n: (e, b, 0))
        w_spec = pl.BlockSpec((E_blk, IN, TN), lambda e, b, n: (e, 0, n))
        s_spec = pl.BlockSpec((E_blk, 1, TN), lambda e, b, n: (e, 0, n))
        o_spec = pl.BlockSpec((E_blk, TB, TN), lambda e, b, n: (e, b, n))
        in_traffic = x_hbm + n_b * w_hbm

    compute_dtype = jnp.bfloat16 if use_bf16 else jnp.float32

    cost = pl.CostEstimate(
        flops=2 * E * B * IN * OUT,
        transcendentals=0,
        bytes_accessed=in_traffic + E * OUT * b_isz + E * B * OUT * o_isz,
    )

    kernel = functools.partial(
        _ensemble_fc_kernel, e_blk=E_blk, compute_dtype=compute_dtype
    )

    return pl.pallas_call(
        kernel,
        out_shape=jax.ShapeDtypeStruct((E, B, OUT), out_dtype),
        grid_spec=pltpu.PrefetchScalarGridSpec(
            num_scalar_prefetch=0,
            grid=grid,
            in_specs=[x_spec, w_spec, s_spec],
            out_specs=o_spec,
        ),
        compiler_params=pltpu.CompilerParams(
            # IN is carried whole (no reduction grid axis) -> every axis is
            # parallel, so the grid can shard across both v7x TensorCores.
            dimension_semantics=("parallel", "parallel", "parallel"),
            vmem_limit_bytes=vmem_limit,
        ),
        cost_estimate=cost,
    )(x, weight, bias)


if __name__ == "__main__":
    # Small shapes consistent with the module's forward.
    ensemble_size = 4
    batch = 8
    in_features = 32
    out_features = 32

    key = jax.random.PRNGKey(0)
    kx, kw, kb = jax.random.split(key, 3)

    # reset_parameters() is a no-op in the reference module, so use a
    # deterministic synthetic init.
    x = jax.random.normal(kx, (ensemble_size, batch, in_features), jnp.float32)
    weight = 0.1 * jax.random.normal(
        kw, (ensemble_size, in_features, out_features), jnp.float32
    )
    bias = 0.01 * jax.random.normal(
        kb, (ensemble_size, 1, out_features), jnp.float32
    )

    # Reference (torch.bmm + bias equivalent) in f32.
    ref = jnp.einsum("ebi,eio->ebo", x, weight) + bias

    # Exact f32 path: tight tolerance.
    out_f32 = jax.block_until_ready(ensemble_fc(x, weight, bias, use_bf16=False))
    assert out_f32.shape == (ensemble_size, batch, out_features)
    assert jnp.allclose(out_f32, ref, atol=1e-3, rtol=1e-3)

    # Default bf16-MXU path (in-kernel cast): looser tolerance.
    out_bf16 = jax.block_until_ready(ensemble_fc(x, weight, bias, use_bf16=True))
    assert out_bf16.shape == (ensemble_size, batch, out_features)
    assert jnp.allclose(out_bf16, ref, atol=5e-2, rtol=5e-2)

    print("KERNEL_OK")
</pallas_src>

<mosaic_0001>
module attributes {stable_mosaic.version = 11 : i64} {
  func.func @_ensemble_fc_kernel(%arg0: i32, %arg1: i32, %arg2: i32, %arg3: memref<2x8x32xf32, #tpu.memory_space<vmem>>, %arg4: memref<2x32x32xf32, #tpu.memory_space<vmem>>, %arg5: memref<2x1x32xf32, #tpu.memory_space<vmem>>, %arg6: memref<2x8x32xf32, #tpu.memory_space<vmem>>) attributes {dimension_semantics = [#tpu.dimension_semantics<parallel>, #tpu.dimension_semantics<parallel>, #tpu.dimension_semantics<parallel>], iteration_bounds = array<i64: 2, 1, 1>, scalar_prefetch = 0 : i64, scratch_operands = 0 : i64, tpu.core_type = #tpu.core_type<tc>, window_params = [{transform_indices = @transform_0, window_bounds = array<i64: 2, 8, 32>}, {transform_indices = @transform_1, window_bounds = array<i64: 2, 32, 32>}, {transform_indices = @transform_2, window_bounds = array<i64: 2, 1, 32>}, {transform_indices = @transform_3, window_bounds = array<i64: 2, 8, 32>}]} {
    %c0 = arith.constant 0 : index
    %c0_0 = arith.constant 0 : index
    %c0_1 = arith.constant 0 : index
    %0 = vector.load %arg3[%c0, %c0_0, %c0_1] : memref<2x8x32xf32, #tpu.memory_space<vmem>>, vector<1x8x32xf32>
    %1 = vector.shape_cast %0 : vector<1x8x32xf32> to vector<8x32xf32>
    %c0_2 = arith.constant 0 : index
    %c0_3 = arith.constant 0 : index
    %c0_4 = arith.constant 0 : index
    %2 = vector.load %arg4[%c0_2, %c0_3, %c0_4] : memref<2x32x32xf32, #tpu.memory_space<vmem>>, vector<1x32x32xf32>
    %3 = vector.shape_cast %2 : vector<1x32x32xf32> to vector<32x32xf32>
    %cst = arith.constant dense<0.000000e+00> : vector<8x32xf32>
    %4 = tpu.matmul %1, %3, %cst {dimension_numbers = #tpu.dot_dimension_numbers<[1], [0], [0], [1], [0, 0, 1, 1], [], []>} : vector<8x32xf32>, vector<32x32xf32>, vector<8x32xf32> -> vector<8x32xf32>
    %c0_5 = arith.constant 0 : index
    %c0_6 = arith.constant 0 : index
    %c0_7 = arith.constant 0 : index
    %5 = vector.load %arg5[%c0_5, %c0_6, %c0_7] : memref<2x1x32xf32, #tpu.memory_space<vmem>>, vector<1x1x32xf32>
    %6 = vector.shape_cast %5 : vector<1x1x32xf32> to vector<1x32xf32>
    %7 = vector.broadcast %6 : vector<1x32xf32> to vector<8x32xf32>
    %8 = arith.addf %4, %7 : vector<8x32xf32>
    %c0_8 = arith.constant 0 : index
    %c0_9 = arith.constant 0 : index
    %c0_10 = arith.constant 0 : index
    %9 = vector.load %arg6[%c0_8, %c0_9, %c0_10] : memref<2x8x32xf32, #tpu.memory_space<vmem>>, vector<1x8x32xf32>
    %10 = vector.shape_cast %9 : vector<1x8x32xf32> to vector<8x32xf32>
    %11 = vector.shape_cast %8 : vector<8x32xf32> to vector<1x8x32xf32>
    tpu.vector_store %arg6[%c0_8, %c0_9, %c0_10], %11 {strides = array<i32>} : memref<2x8x32xf32, #tpu.memory_space<vmem>>, vector<1x8x32xf32>,
    %c1 = arith.constant 1 : index
    %c0_11 = arith.constant 0 : index
    %c0_12 = arith.constant 0 : index
    %12 = vector.load %arg3[%c1, %c0_11, %c0_12] : memref<2x8x32xf32, #tpu.memory_space<vmem>>, vector<1x8x32xf32>
    %13 = vector.shape_cast %12 : vector<1x8x32xf32> to vector<8x32xf32>
    %c1_13 = arith.constant 1 : index
    %c0_14 = arith.constant 0 : index
    %c0_15 = arith.constant 0 : index
    %14 = vector.load %arg4[%c1_13, %c0_14, %c0_15] : memref<2x32x32xf32, #tpu.memory_space<vmem>>, vector<1x32x32xf32>
    %15 = vector.shape_cast %14 : vector<1x32x32xf32> to vector<32x32xf32>
    %cst_16 = arith.constant dense<0.000000e+00> : vector<8x32xf32>
    %16 = tpu.matmul %13, %15, %cst_16 {dimension_numbers = #tpu.dot_dimension_numbers<[1], [0], [0], [1], [0, 0, 1, 1], [], []>} : vector<8x32xf32>, vector<32x32xf32>, vector<8x32xf32> -> vector<8x32xf32>
    %c1_17 = arith.constant 1 : index
    %c0_18 = arith.constant 0 : index
    %c0_19 = arith.constant 0 : index
    %17 = vector.load %arg5[%c1_17, %c0_18, %c0_19] : memref<2x1x32xf32, #tpu.memory_space<vmem>>, vector<1x1x32xf32>
    %18 = vector.shape_cast %17 : vector<1x1x32xf32> to vector<1x32xf32>
    %19 = vector.broadcast %18 : vector<1x32xf32> to vector<8x32xf32>
    %20 = arith.addf %16, %19 : vector<8x32xf32>
    %c1_20 = arith.constant 1 : index
    %c0_21 = arith.constant 0 : index
    %c0_22 = arith.constant 0 : index
    %21 = vector.load %arg6[%c1_20, %c0_21, %c0_22] : memref<2x8x32xf32, #tpu.memory_space<vmem>>, vector<1x8x32xf32>
    %22 = vector.shape_cast %21 : vector<1x8x32xf32> to vector<8x32xf32>
    %23 = vector.shape_cast %20 : vector<8x32xf32> to vector<1x8x32xf32>
    tpu.vector_store %arg6[%c1_20, %c0_21, %c0_22], %23 {strides = array<i32>} : memref<2x8x32xf32, #tpu.memory_space<vmem>>, vector<1x8x32xf32>,
    return
  }
  func.func @transform_0(%arg0: i32, %arg1: i32, %arg2: i32) -> (i32, i32, i32) {
    %c0_i32 = arith.constant 0 : i32
    %c0_i32_0 = arith.constant 0 : i32
    return %arg0, %arg2, %c0_i32 : i32, i32, i32
  }
  func.func @transform_1(%arg0: i32, %arg1: i32, %arg2: i32) -> (i32, i32, i32) {
    %c0_i32 = arith.constant 0 : i32
    %c0_i32_0 = arith.constant 0 : i32
    return %arg0, %c0_i32, %arg1 : i32, i32, i32
  }
  func.func @transform_2(%arg0: i32, %arg1: i32, %arg2: i32) -> (i32, i32, i32) {
    %c0_i32 = arith.constant 0 : i32
    %c0_i32_0 = arith.constant 0 : i32
    return %arg0, %c0_i32, %arg1 : i32, i32, i32
  }
  func.func @transform_3(%arg0: i32, %arg1: i32, %arg2: i32) -> (i32, i32, i32) {
    %c0_i32 = arith.constant 0 : i32
    return %arg0, %arg2, %arg1 : i32, i32, i32
  }
}

</mosaic_0001>

<llo_original>
// kernel: tpu_custom_call.1
$region0: #{tpu_custom_call.1}
  #allocation0 [shape = 'u32[]', space=smem, size = 0x4, offset = 0x4, fixed_abs, tag = 'smem constant byte address 0x4 - core index']
  #allocation1 [shape = 'u32[144,128]{1,0:T(1,128)}', space=vmem, size = 0x12000, scoped, tag = 'internal scratch']
  %s0 = inlined_call_operand.hbm [shape: f32[4,8,32], index: 0, kind: input, shape index: {}]
  %s1 = inlined_call_operand.hbm [shape: f32[4,32,32], index: 1, kind: input, shape index: {}]
  %s2 = inlined_call_operand.vmem [shape: f32[4,1,32], index: 2, kind: input, shape index: {}]
  %s3 = inlined_call_operand.hbm [shape: f32[4,8,32], index: 3, kind: output, shape index: {}]
  %s4 = sld [smem:[#allocation0]]
  $region53: #{tpu_custom_call.1} parent=0
    _
  %s6 = ssub.s32 1, %s4
  %s7 = scalar_select 0, %s6, %s4
  $region1: #{tpu_custom_call.1} parent=0
    #allocation2 [shape = 'u8[16384]{0}', space=vmem, size = 0x4000, scoped, tag = 'input window, operand 0']
    #allocation3 [shape = 's32[2]{0}', space=sflag, size = 0x8, scoped, tag = 'scoped memory for tpu_custom_call.1']
    #allocation4 [shape = 's32[2]{0}', space=sflag, size = 0x8, scoped, tag = 'scoped memory for tpu_custom_call.1']
    #allocation5 [shape = 'u8[65536]{0}', space=vmem, size = 0x10000, scoped, tag = 'input window, operand 1']
    #allocation6 [shape = 's32[2]{0}', space=sflag, size = 0x8, scoped, tag = 'scoped memory for tpu_custom_call.1']
    #allocation7 [shape = 'u8[16384]{0}', space=vmem, size = 0x4000, scoped, tag = 'output window, operand 0']
    %8 = vsyncpa [#allocation3], 0
    %s9 = scalar_lea.sflag [#allocation3], 1
    %10 = vsyncpa %s9, 0
    %11 = vsyncpa [#allocation6], 0
    %s12 = scalar_lea.sflag [#allocation6], 1
    %13 = vsyncpa %s12, 0
    %14 = vsyncpa [#allocation4], 0
    %s15 = scalar_lea.sflag [#allocation4], 1
    %16 = vsyncpa %s15, 0
    loop: start=0, step=1, limit=4
    $region2: #{tpu_custom_call.1} parent=1 // loop_pre_header
      _
    $region3: #{tpu_custom_call.1} parent=1 // loop_header
      %s18 = sphi 0, %s22
      %p19 = scmp.ge.s32.totalorder %s18, 4
      %s25 = sphi 0, %s44
      %s26 = sphi 0, %s40
      %s27 = sphi 0, %s36
      %s28 = sphi 0, %s25
      %s29 = sphi 0, %s26
      %s30 = sphi 0, %s27
      %s31 = sphi 0, %s28
      %s32 = sphi 0, %s29
      %s33 = sphi 0, %s30
      %s49 = sphi 0, %s51
      %s52 = sphi 0, %s49
      %s53 = sphi 0, %s52
      %s69 = sphi 0, %s53
      %s77 = sphi 0, %s79
      %s80 = sphi 0, %s77
      %s81 = sphi 0, %s80
      %s97 = sphi 0, %s81
      %s105 = sphi 0, %s107
      %s108 = sphi 0, %s105
      %s109 = sphi 0, %s108
      %s125 = sphi 0, %s109
      %s135 = sphi 0, %s137
      %s138 = sphi 0, %s135
      %s139 = sphi 0, %s138
      %s155 = sphi 0, %s139
    $region4: #{tpu_custom_call.1} parent=1 // loop_header_branch
      %21 = sbr.rel (%p19) target = $region8
    $region5: #{tpu_custom_call.1} parent=1 // loop_body
      %s23 = ssub.s32 %s18, 1
      %s24 = ssub.s32 %s18, 2
      %s34 = sadd.s32 1, %s27
      %p35 = scmp.ge.s32.totalorder %s34, 1
      %s36 = scalar_select %p35, 0, %s34
      %s37 = sadd.s32 1, %s26
      %s38 = scalar_select %p35, %s37, %s26
      %p39 = scmp.ge.s32.totalorder %s38, 1
      %s40 = scalar_select %p39, 0, %s38
      %s41 = sadd.s32 1, %s25
      %s42 = scalar_select %p39, %s41, %s25
      %p43 = scmp.ge.s32.totalorder %s42, 2
      %s44 = scalar_select %p43, 0, %s42
      %s45 = ssub.s32 %s25, %s44
      %s46 = ssub.s32 %s27, %s36
      %s47 = sor.u32 %s45, %s46
      %p48 = scmp.eq.s32.totalorder %s47, 0
      %s50 = sadd.s32 %s49, 1
      %s51 = scalar_select %p48, %s49, %s50
      %p54 = pneg %p48
      %p55 = scmp.eq.s32.totalorder %s18, 1
      %p56 = por %p54, %p55
      %p57 = scmp.ne.s32.totalorder %s49, %s52
      %p58 = scmp.eq.s32.totalorder %s18, 0
      %p59 = por %p57, %p58
      %p60 = scmp.ne.s32.totalorder %s49, %s52
      %p61 = scmp.eq.s32.totalorder %s23, 1
      %p62 = por %p60, %p61
      %p63 = scmp.ne.s32.totalorder %s52, %s53
      %p64 = scmp.eq.s32.totalorder %s23, 0
      %p65 = por %p63, %p64
      %p66 = scmp.ne.s32.totalorder %s52, %s53
      %p67 = scmp.eq.s32.totalorder %s24, 1
      %p68 = por %p66, %p67
      %p70 = scmp.ne.s32.totalorder %s53, %s69
      %p71 = scmp.eq.s32.totalorder %s24, 0
      %p72 = por %p70, %p71
      %s73 = ssub.s32 %s25, %s44
      %s74 = ssub.s32 %s26, %s40
      %s75 = sor.u32 %s73, %s74
      %p76 = scmp.eq.s32.totalorder %s75, 0
      %s78 = sadd.s32 %s77, 1
      %s79 = scalar_select %p76, %s77, %s78
      %p82 = pneg %p76
      %p83 = scmp.eq.s32.totalorder %s18, 1
      %p84 = por %p82, %p83
      %p85 = scmp.ne.s32.totalorder %s77, %s80
      %p86 = scmp.eq.s32.totalorder %s18, 0
      %p87 = por %p85, %p86
      %p88 = scmp.ne.s32.totalorder %s77, %s80
      %p89 = scmp.eq.s32.totalorder %s23, 1
      %p90 = por %p88, %p89
      %p91 = scmp.ne.s32.totalorder %s80, %s81
      %p92 = scmp.eq.s32.totalorder %s23, 0
      %p93 = por %p91, %p92
      %p94 = scmp.ne.s32.totalorder %s80, %s81
      %p95 = scmp.eq.s32.totalorder %s24, 1
      %p96 = por %p94, %p95
      %p98 = scmp.ne.s32.totalorder %s81, %s97
      %p99 = scmp.eq.s32.totalorder %s24, 0
      %p100 = por %p98, %p99
      %s101 = ssub.s32 %s25, %s44
      %s102 = ssub.s32 %s26, %s40
      %s103 = sor.u32 %s101, %s102
      %p104 = scmp.eq.s32.totalorder %s103, 0
      %s106 = sadd.s32 %s105, 1
      %s107 = scalar_select %p104, %s105, %s106
      %p110 = pneg %p104
      %p111 = scmp.eq.s32.totalorder %s18, 1
      %p112 = por %p110, %p111
      %p113 = scmp.ne.s32.totalorder %s105, %s108
      %p114 = scmp.eq.s32.totalorder %s18, 0
      %p115 = por %p113, %p114
      %p116 = scmp.ne.s32.totalorder %s105, %s108
      %p117 = scmp.eq.s32.totalorder %s23, 1
      %p118 = por %p116, %p117
      %p119 = scmp.ne.s32.totalorder %s108, %s109
      %p120 = scmp.eq.s32.totalorder %s23, 0
      %p121 = por %p119, %p120
      %p122 = scmp.ne.s32.totalorder %s108, %s109
      %p123 = scmp.eq.s32.totalorder %s24, 1
      %p124 = por %p122, %p123
      %p126 = scmp.ne.s32.totalorder %s109, %s125
      %p127 = scmp.eq.s32.totalorder %s24, 0
      %p128 = por %p126, %p127
      %s129 = ssub.s32 %s25, %s44
      %s130 = ssub.s32 %s27, %s36
      %s131 = sor.u32 %s129, %s130
      %s132 = ssub.s32 %s26, %s40
      %s133 = sor.u32 %s131, %s132
      %p134 = scmp.eq.s32.totalorder %s133, 0
      %s136 = sadd.s32 %s135, 1
      %s137 = scalar_select %p134, %s135, %s136
      %p140 = pneg %p134
      %p141 = scmp.eq.s32.totalorder %s18, 1
      %p142 = por %p140, %p141
      %p143 = scmp.ne.s32.totalorder %s135, %s138
      %p144 = scmp.eq.s32.totalorder %s18, 0
      %p145 = por %p143, %p144
      %p146 = scmp.ne.s32.totalorder %s135, %s138
      %p147 = scmp.eq.s32.totalorder %s23, 1
      %p148 = por %p146, %p147
      %p149 = scmp.ne.s32.totalorder %s138, %s139
      %p150 = scmp.eq.s32.totalorder %s23, 0
      %p151 = por %p149, %p150
      %p152 = scmp.ne.s32.totalorder %s138, %s139
      %p153 = scmp.eq.s32.totalorder %s24, 1
      %p154 = por %p152, %p153
      %p156 = scmp.ne.s32.totalorder %s139, %s155
      %p157 = scmp.eq.s32.totalorder %s24, 0
      %p158 = por %p156, %p157
      %p159 = scmp.le.s32.totalorder 1, %s18
      %p160 = scmp.lt.s32.totalorder %s18, 3
      %p161 = pnand %p159, %p160
      %p162 = pneg %p161
      // Predicated region
      $region9: #{tpu_custom_call.1} parent=5 // pred_check
        _
      $region10: #{tpu_custom_call.1} parent=5 // pred_check_branch
        %164 = sbr.rel (%p161) target = $region12
      $region11: #{tpu_custom_call.1} parent=5 // pred_region
        %s165 = ssub.s32 %s18, 1
      $region12: #{tpu_custom_call.1} parent=5 // pred_fallthru
        _
      %p166 = scmp.lt.s32.totalorder %s18, 2
      // Predicated region
      $region13: #{tpu_custom_call.1} parent=5 // pred_check
        %p167 = pneg %p166
      $region14: #{tpu_custom_call.1} parent=5 // pred_check_branch
        %169 = sbr.rel (%p167) target = $region16
      $region15: #{tpu_custom_call.1} parent=5 // pred_region
        // Predicated region
        $region17: #{tpu_custom_call.1} parent=15 // pred_check
          %p170 = pneg %p59
        $region18: #{tpu_custom_call.1} parent=15 // pred_check_branch
          %172 = sbr.rel (%p170) target = $region20
        $region19: #{tpu_custom_call.1} parent=15 // pred_region
          %s173 = sand.u32 %s49, 1
          %s174 = scalar_lea.sflag [#allocation3], %s173
          %s175 = sand.u32 %s49, 1
          %s176 = smul.addr %s175, 16
          %s177 = scalar_lea.vmem [#allocation2], %s176
          %s178 = smul.u32 2, %s25
          %s180 = ssub.s32 256, 256
          %181 = vsyncadd %s174, %s180
          %s182 = sadd.s32 %s27, %s178
          %s183 = smul.addr %s182, 128
          %s184 = scalar_lea.hbm %s0, %s183
          %s185 = sshll.u32 %s177, 4
          %s186 = int_to_ptr.vmem [resolvable:$true] %s185
          %191 = dma.hbm_to_vmem [thread:$0]  %s184, 256, %s186, %s174, 128, 128, 8
        $region20: #{tpu_custom_call.1} parent=15 // pred_fallthru
          _
        // Predicated region
        $region21: #{tpu_custom_call.1} parent=15 // pred_check
          %p192 = pneg %p87
        $region22: #{tpu_custom_call.1} parent=15 // pred_check_branch
          %194 = sbr.rel (%p192) target = $region24
        $region23: #{tpu_custom_call.1} parent=15 // pred_region
          %s195 = sand.u32 %s77, 1
          %s196 = scalar_lea.sflag [#allocation6], %s195
          %s197 = sand.u32 %s77, 1
          %s198 = smul.addr %s197, 64
          %s199 = scalar_lea.vmem [#allocation5], %s198
          %s200 = smul.u32 2, %s25
          %s202 = ssub.s32 1024, 1024
          %203 = vsyncadd %s196, %s202
          %s204 = smul.addr %s200, 4
          %s205 = sadd.s32 %s26, %s204
          %s206 = smul.addr %s205, 128
          %s207 = scalar_lea.hbm %s1, %s206
          %s208 = sshll.u32 %s199, 4
          %s209 = int_to_ptr.vmem [resolvable:$true] %s208
          %214 = dma.hbm_to_vmem [thread:$0]  %s207, 1024, %s209, %s196, 128, 128, 8
        $region24: #{tpu_custom_call.1} parent=15 // pred_fallthru
          _
        // Predicated region
        $region25: #{tpu_custom_call.1} parent=15 // pred_check
          %p215 = pneg %p115
        $region26: #{tpu_custom_call.1} parent=15 // pred_check_branch
          %217 = sbr.rel (%p215) target = $region28
        $region27: #{tpu_custom_call.1} parent=15 // pred_region
          %s218 = smul.u32 2, %s25
          %p219 = scmp.lt.s32.totalorder %s218, 3
          %s220 = scalar_select %p219, %s218, 3
          %p221 = scmp.lt.s32.totalorder %s26, 0
          %s222 = scalar_select %p221, %s26, 0
          %s223 = sadd.s32 %s222, %s220
          %s224 = scalar_lea.vmem %s2, %s223
          %s225 = smul.u32 2, %s25
        $region28: #{tpu_custom_call.1} parent=15 // pred_fallthru
          _
      $region16: #{tpu_custom_call.1} parent=5 // pred_fallthru
        _
      %p226 = scmp.le.s32.totalorder 1, %s18
      %p227 = scmp.lt.s32.totalorder %s18, 3
      %p228 = pnand %p226, %p227
      %p229 = pneg %p228
      // Predicated region
      $region29: #{tpu_custom_call.1} parent=5 // pred_check
        _
      $region30: #{tpu_custom_call.1} parent=5 // pred_check_branch
        %231 = sbr.rel (%p228) target = $region32
      $region31: #{tpu_custom_call.1} parent=5 // pred_region
        %s232 = ssub.s32 %s18, 1
        %s233 = sand.u32 %s52, 1
        %s234 = scalar_lea.sflag [#allocation3], %s233
        %s235 = sand.u32 %s52, 1
        %s236 = smul.addr %s235, 16
        %s237 = scalar_lea.vmem [#allocation2], %s236
        // Predicated region
        $region33: #{tpu_custom_call.1} parent=31 // pred_check
          %p238 = pneg %p65
        $region34: #{tpu_custom_call.1} parent=31 // pred_check_branch
          %240 = sbr.rel (%p238) target = $region36
        $region35: #{tpu_custom_call.1} parent=31 // pred_region
          %241 = dma.done %s234, 256
        $region36: #{tpu_custom_call.1} parent=31 // pred_fallthru
          _
        %s242 = sand.u32 %s80, 1
        %s243 = scalar_lea.sflag [#allocation6], %s242
        %s244 = sand.u32 %s80, 1
        %s245 = smul.addr %s244, 64
        %s246 = scalar_lea.vmem [#allocation5], %s245
        // Predicated region
        $region37: #{tpu_custom_call.1} parent=31 // pred_check
          %p247 = pneg %p93
        $region38: #{tpu_custom_call.1} parent=31 // pred_check_branch
          %249 = sbr.rel (%p247) target = $region40
        $region39: #{tpu_custom_call.1} parent=31 // pred_region
          %250 = dma.done %s243, 1024
        $region40: #{tpu_custom_call.1} parent=31 // pred_fallthru
          _
        %s251 = sand.u32 %s52, 1
        %s252 = scalar_lea.sflag [#allocation3], %s251
        %s253 = sand.u32 %s52, 1
        %s254 = smul.addr %s253, 16
        %s255 = scalar_lea.vmem [#allocation2], %s254
        %p256 = pneg %p65
        %p257 = pneg %p62
        %s258 = sand.u32 %s80, 1
        %s259 = scalar_lea.sflag [#allocation6], %s258
        %s260 = sand.u32 %s80, 1
        %s261 = smul.addr %s260, 64
        %s262 = scalar_lea.vmem [#allocation5], %s261
        %p263 = pneg %p93
        %p264 = pneg %p90
        %s265 = smul.u32 2, %s28
        %p266 = scmp.lt.s32.totalorder %s265, 3
        %s267 = scalar_select %p266, %s265, 3
        %p268 = scmp.lt.s32.totalorder %s29, 0
        %s269 = scalar_select %p268, %s29, 0
        %s270 = sadd.s32 %s269, %s267
        %s271 = scalar_lea.vmem %s2, %s270
        %p272 = pneg %p121
        %p273 = pneg %p118
        %p274 = pneg %p151
        %p275 = pneg %p148
        %s276 = sand.u32 %s138, 1
        %s277 = scalar_lea.sflag [#allocation4], %s276
        %s278 = sand.u32 %s138, 1
        %s279 = smul.addr %s278, 16
        %s280 = scalar_lea.vmem [#allocation7], %s279
        %s281 = smul.u32 2, %s28
        %s282 = smul.u32 2, %s28
        %s283 = smul.u32 2, %s28
        %p284 = scmp.lt.s32.totalorder %s283, 3
        %s285 = scalar_select %p284, %s283, 3
        %p286 = scmp.lt.s32.totalorder %s29, 0
        %s287 = scalar_select %p286, %s29, 0
        %s288 = sadd.s32 %s287, %s285
        %s289 = scalar_lea.vmem %s2, %s288
        %s290 = smul.u32 2, %s28
        %s291 = smul.u32 2, %s28
        %v292 = vld [vmem:[%s237] sm:$0xff]
        %v293 = vld [vmem:[%s246] sm:$0xff]
        %v294 = vld [vmem:[%s246 + $0x8] sm:$0xff]
        %v295 = vld [vmem:[%s246 + $0x10] sm:$0xff]
        %v296 = vld [vmem:[%s246 + $0x18] sm:$0xff]
        %v297 = vld [vmem:[%s289] sm:$0x1]
        %v299 = vlaneseq
        %v300 = vshrl.u32 %v299, 7
        %v301 = vsub.s32 0, %v300
        %v302 = vrot.slane %v297, %v301
        %vm304 = vcmask 261120
        %v306 = vsel %vm304, %v292, 0
        %308 = vmatprep.subr.mxu0 0.0
        %309 = vmatpush1.msra.mxu0 %v293
        %310 = vmatprep.subr.mxu0 0.0
        %311 = vmatpush1.msra.mxu0 %v294
        %312 = vmatprep.subr.mxu0 0.0
        %313 = vmatpush1.msra.mxu0 %v295
        %314 = vmatprep.subr.mxu0 0.0
        %315 = vmatpush1.msra.mxu0 %v296
        %316 = vmatprep.subr.mxu0 0.0
        %317 = vmatpush1.msra.mxu0 0.0
        %318 = vmatprep.subr.mxu0 0.0
        %319 = vmatpush1.msra.mxu0 0.0
        %320 = vmatprep.subr.mxu0 0.0
        %321 = vmatpush1.msra.mxu0 0.0
        %322 = vmatprep.subr.mxu0 0.0
        %323 = vmatpush1.msra.mxu0 0.0
        %324 = vmatprep.subr.mxu0 0.0
        %325 = vmatpush1.msra.mxu0 0.0
        %326 = vmatprep.subr.mxu0 0.0
        %327 = vmatpush1.msra.mxu0 0.0
        %328 = vmatprep.subr.mxu0 0.0
        %329 = vmatpush1.msra.mxu0 0.0
        %330 = vmatprep.subr.mxu0 0.0
        %331 = vmatpush1.msra.mxu0 0.0
        %332 = vmatprep.subr.mxu0 0.0
        %333 = vmatpush1.msra.mxu0 0.0
        %334 = vmatprep.subr.mxu0 0.0
        %335 = vmatpush1.msra.mxu0 0.0
        %336 = vmatprep.subr.mxu0 0.0
        %337 = vmatpush1.msra.mxu0 0.0
        %338 = vmatprep.subr.mxu0 0.0
        %339 = vmatpush1.msra.mxu0 0.0
        %340 = vmatprep.subr.mxu0 0.0
        %341 = vmatpush1.msra.mxu0 0.0
        %342 = vmatprep.subr.mxu0 0.0
        %343 = vmatpush1.msra.mxu0 0.0
        %344 = vmatprep.subr.mxu0 0.0
        %345 = vmatpush1.msra.mxu0 0.0
        %346 = vmatprep.subr.mxu0 0.0
        %347 = vmatpush1.msra.mxu0 0.0
        %348 = vmatprep.subr.mxu0 0.0
        %349 = vmatpush1.msra.mxu0 0.0
        %350 = vmatprep.subr.mxu0 0.0
        %351 = vmatpush1.msra.mxu0 0.0
        %352 = vmatprep.subr.mxu0 0.0
        %353 = vmatpush1.msra.mxu0 0.0
        %354 = vmatprep.subr.mxu0 0.0
        %355 = vmatpush1.msra.mxu0 0.0
        %356 = vmatprep.subr.mxu0 0.0
        %357 = vmatpush1.msra.mxu0 0.0
        %358 = vmatprep.subr.mxu0 0.0
        %359 = vmatpush1.msra.mxu0 0.0
        %360 = vmatprep.subr.mxu0 0.0
        %361 = vmatpush1.msra.mxu0 0.0
        %362 = vmatprep.subr.mxu0 0.0
        %363 = vmatpush1.msra.mxu0 0.0
        %364 = vmatprep.subr.mxu0 0.0
        %365 = vmatpush1.msra.mxu0 0.0
        %366 = vmatprep.subr.mxu0 0.0
        %367 = vmatpush1.msra.mxu0 0.0
        %368 = vmatprep.subr.mxu0 0.0
        %369 = vmatpush1.msra.mxu0 0.0
        %370 = vmatprep.subr.mxu0 0.0
        %371 = vmatpush1.msra.mxu0 0.0
        %372 = vmatprep.mubr.f32.mxu0 0.0
        %373 = vmatmul.mubr.f32.gmra.mrb[0].mxu0 %v306
        %v374 = vpop.f32.mrb[0].mxu0
        %v375 = vadd.f32 %v302, %v374
        %v376 = vpop.f32.mrb[0].mxu0
        %377 = vdwg.mxu0
        %378 = vst.msk [vmem:[%s280] sm:$0xff] %vm304, %v375
        %s379 = scalar_lea.vmem %s237, 8 [#allocation2]
        %v380 = vld [vmem:[%s379] sm:$0xff]
        %s381 = scalar_lea.vmem %s246, 32 [#allocation5]
        %v382 = vld [vmem:[%s381] sm:$0xff]
        %v383 = vld [vmem:[%s381 + $0x8] sm:$0xff]
        %v384 = vld [vmem:[%s381 + $0x10] sm:$0xff]
        %v385 = vld [vmem:[%s381 + $0x18] sm:$0xff]
        %s386 = scalar_lea.vmem %s289, 1
        %v387 = vld [vmem:[%s386] sm:$0x1]
        %v389 = vlaneseq
        %v390 = vshrl.u32 %v389, 7
        %v391 = vsub.s32 0, %v390
        %v392 = vrot.slane %v387, %v391
        %v395 = vsel %vm304, %v380, 0
        %397 = vmatprep.subr.mxu0 0.0
        %398 = vmatpush1.msra.mxu0 %v382
        %399 = vmatprep.subr.mxu0 0.0
        %400 = vmatpush1.msra.mxu0 %v383
        %401 = vmatprep.subr.mxu0 0.0
        %402 = vmatpush1.msra.mxu0 %v384
        %403 = vmatprep.subr.mxu0 0.0
        %404 = vmatpush1.msra.mxu0 %v385
        %405 = vmatprep.subr.mxu0 0.0
        %406 = vmatpush1.msra.mxu0 0.0
        %407 = vmatprep.subr.mxu0 0.0
        %408 = vmatpush1.msra.mxu0 0.0
        %409 = vmatprep.subr.mxu0 0.0
        %410 = vmatpush1.msra.mxu0 0.0
        %411 = vmatprep.subr.mxu0 0.0
        %412 = vmatpush1.msra.mxu0 0.0
        %413 = vmatprep.subr.mxu0 0.0
        %414 = vmatpush1.msra.mxu0 0.0
        %415 = vmatprep.subr.mxu0 0.0
        %416 = vmatpush1.msra.mxu0 0.0
        %417 = vmatprep.subr.mxu0 0.0
        %418 = vmatpush1.msra.mxu0 0.0
        %419 = vmatprep.subr.mxu0 0.0
        %420 = vmatpush1.msra.mxu0 0.0
        %421 = vmatprep.subr.mxu0 0.0
        %422 = vmatpush1.msra.mxu0 0.0
        %423 = vmatprep.subr.mxu0 0.0
        %424 = vmatpush1.msra.mxu0 0.0
        %425 = vmatprep.subr.mxu0 0.0
        %426 = vmatpush1.msra.mxu0 0.0
        %427 = vmatprep.subr.mxu0 0.0
        %428 = vmatpush1.msra.mxu0 0.0
        %429 = vmatprep.subr.mxu0 0.0
        %430 = vmatpush1.msra.mxu0 0.0
        %431 = vmatprep.subr.mxu0 0.0
        %432 = vmatpush1.msra.mxu0 0.0
        %433 = vmatprep.subr.mxu0 0.0
        %434 = vmatpush1.msra.mxu0 0.0
        %435 = vmatprep.subr.mxu0 0.0
        %436 = vmatpush1.msra.mxu0 0.0
        %437 = vmatprep.subr.mxu0 0.0
        %438 = vmatpush1.msra.mxu0 0.0
        %439 = vmatprep.subr.mxu0 0.0
        %440 = vmatpush1.msra.mxu0 0.0
        %441 = vmatprep.subr.mxu0 0.0
        %442 = vmatpush1.msra.mxu0 0.0
        %443 = vmatprep.subr.mxu0 0.0
        %444 = vmatpush1.msra.mxu0 0.0
        %445 = vmatprep.subr.mxu0 0.0
        %446 = vmatpush1.msra.mxu0 0.0
        %447 = vmatprep.subr.mxu0 0.0
        %448 = vmatpush1.msra.mxu0 0.0
        %449 = vmatprep.subr.mxu0 0.0
        %450 = vmatpush1.msra.mxu0 0.0
        %451 = vmatprep.subr.mxu0 0.0
        %452 = vmatpush1.msra.mxu0 0.0
        %453 = vmatprep.subr.mxu0 0.0
        %454 = vmatpush1.msra.mxu0 0.0
        %455 = vmatprep.subr.mxu0 0.0
        %456 = vmatpush1.msra.mxu0 0.0
        %457 = vmatprep.subr.mxu0 0.0
        %458 = vmatpush1.msra.mxu0 0.0
        %459 = vmatprep.subr.mxu0 0.0
        %460 = vmatpush1.msra.mxu0 0.0
        %461 = vmatprep.mubr.f32.mxu0 0.0
        %462 = vmatmul.mubr.f32.gmra.mrb[0].mxu0 %v395
        %v463 = vpop.f32.mrb[0].mxu0
        %v464 = vadd.f32 %v392, %v463
        %v465 = vpop.f32.mrb[0].mxu0
        %466 = vdwg.mxu0
        %s467 = scalar_lea.vmem %s280, 8 [#allocation7]
        %468 = vst.msk [vmem:[%s467] sm:$0xff] %vm304, %v464
        %s469 = sand.u32 %s138, 1
        %s470 = scalar_lea.sflag [#allocation4], %s469
        %s471 = sand.u32 %s138, 1
        %s472 = smul.addr %s471, 16
        %s473 = scalar_lea.vmem [#allocation7], %s472
        // Predicated region
        $region41: #{tpu_custom_call.1} parent=31 // pred_check
          %p474 = pneg %p148
        $region42: #{tpu_custom_call.1} parent=31 // pred_check_branch
          %476 = sbr.rel (%p474) target = $region44
        $region43: #{tpu_custom_call.1} parent=31 // pred_region
          %s477 = smul.u32 2, %s28
          %s479 = ssub.s32 256, 256
          %480 = vsyncadd %s470, %s479
          %s481 = sadd.s32 %s29, %s30
          %s482 = sadd.s32 %s481, %s477
          %s483 = smul.addr %s482, 128
          %s484 = scalar_lea.hbm %s3, %s483
          %s485 = sshll.u32 %s473, 4
          %s486 = int_to_ptr.vmem [resolvable:$true] %s485
          %491 = dma.vmem_to_hbm [thread:$0]  %s486, 256, %s484, %s470, 128, 128, 8
        $region44: #{tpu_custom_call.1} parent=31 // pred_fallthru
          _
      $region32: #{tpu_custom_call.1} parent=5 // pred_fallthru
        _
      %p492 = scmp.le.s32.totalorder 2, %s18
      // Predicated region
      $region45: #{tpu_custom_call.1} parent=5 // pred_check
        %p493 = pneg %p492
      $region46: #{tpu_custom_call.1} parent=5 // pred_check_branch
        %495 = sbr.rel (%p493) target = $region48
      $region47: #{tpu_custom_call.1} parent=5 // pred_region
        %s496 = ssub.s32 %s18, 2
        // Predicated region
        $region49: #{tpu_custom_call.1} parent=47 // pred_check
          %p497 = pneg %p154
        $region50: #{tpu_custom_call.1} parent=47 // pred_check_branch
          %499 = sbr.rel (%p497) target = $region52
        $region51: #{tpu_custom_call.1} parent=47 // pred_region
          %s500 = sand.u32 %s139, 1
          %s501 = scalar_lea.sflag [#allocation4], %s500
          %s502 = sand.u32 %s139, 1
          %s503 = smul.addr %s502, 16
          %s504 = scalar_lea.vmem [#allocation7], %s503
          %505 = dma.done %s501, 256
        $region52: #{tpu_custom_call.1} parent=47 // pred_fallthru
          _
      $region48: #{tpu_custom_call.1} parent=5 // pred_fallthru
        _
    $region6: #{tpu_custom_call.1} parent=1 // loop_footer
      %s22 = sadd.s32 1, %s18
    $region7: #{tpu_custom_call.1} parent=1 // loop_footer_branch
      %17 = sbr.rel target = $region3
    $region8: #{tpu_custom_call.1} parent=1 // loop_exit
      _
    %506 = vsyncpa [#allocation3], 1
    %s507 = scalar_lea.sflag [#allocation3], 1
    %508 = vsyncpa %s507, 1
    %509 = vsyncpa [#allocation6], 1
    %s510 = scalar_lea.sflag [#allocation6], 1
    %511 = vsyncpa %s510, 1
    %512 = vsyncpa [#allocation4], 1
    %s513 = scalar_lea.sflag [#allocation4], 1
    %514 = vsyncpa %s513, 1

</llo_original>
